<compile_context>
chip_gen: v7x
topology: tpu7x:2x2x1
jax: 0.10.0
libtpu: 0.0.40
codegen_flags: <defaults>
</compile_context>

<pallas_src>
import functools

import jax
import jax.numpy as jnp
from jax.experimental import pallas as pl
from jax.experimental.pallas import tpu as pltpu


def _adv_loss_kernel(xs_ref, xt_ref, w1_ref, b1_ref, w2_ref, b2_ref, out_ref, *,
                     inv_n_src, inv_n_tgt):
    w1 = w1_ref[...]          # (H, H)
    b1 = b1_ref[...]          # (1, H)
    w2_row = w2_ref[...]      # (1, H)  fc2 weight laid out as a row
    b2 = b2_ref[0, 0]         # scalar from SMEM

    def discriminator_logits(x):
        # fc1 + relu (MXU matmul + VPU). dropout(p=0.25) -> identity in eval mode.
        h = jnp.maximum(
            jnp.dot(x, w1, preferred_element_type=jnp.float32) + b1, 0.0)
        # fc2 has output width 1: VPU multiply + XLU lane reduce instead of a
        # second MXU matmul round-trip.
        return jnp.sum(h * w2_row, axis=-1, keepdims=True) + b2   # (B, 1)

    z_s = discriminator_logits(xs_ref[...])   # source logits
    z_t = discriminator_logits(xt_ref[...])   # target logits

    # BCE terms with the PyTorch-style -100 clamp on the log values.
    # Single log per branch: log(1 - sigmoid(z)) = log(sigmoid(z)) - z.
    log_p_s = jnp.log(jax.nn.sigmoid(z_s))
    log_p_t = jnp.log(jax.nn.sigmoid(z_t))
    contrib_s = -jnp.maximum(log_p_s, -100.0) * (0.5 * inv_n_src)
    contrib_t = -jnp.maximum(log_p_t - z_t, -100.0) * (0.5 * inv_n_tgt)

    if contrib_s.shape == contrib_t.shape:
        total = jnp.sum(contrib_s + contrib_t)          # one fused XLU reduce
    else:
        total = jnp.sum(contrib_s) + jnp.sum(contrib_t)

    out_ref[0, 0] = total


def adversarial_loss(source, target, w1, b1, w2_row, b2, *,
                     gamma=1.0, max_iter=1000, curr_iter=0):
    """source: (Bs, H), target: (Bt, H) float32.
    w1: (H, H) so that y = x @ w1 + b1, b1: (1, H),
    w2_row: (1, H) (fc2 weight as a row), b2: (1, 1)."""
    # Lambda scheduler: only scales the reversed gradient; forward-parity, unused here.
    _lamb = 2.0 / (1.0 + jnp.exp(-gamma * (curr_iter / max_iter))) - 1.0  # noqa: F841

    n_src, n_tgt = source.shape[0], target.shape[0]
    kernel = functools.partial(_adv_loss_kernel,
                               inv_n_src=1.0 / n_src, inv_n_tgt=1.0 / n_tgt)

    vmem = pl.BlockSpec(memory_space=pltpu.MemorySpace.VMEM)
    smem = pl.BlockSpec(memory_space=pltpu.MemorySpace.SMEM)
    out = pl.pallas_call(
        kernel,
        out_shape=jax.ShapeDtypeStruct((1, 1), jnp.float32),
        in_specs=[vmem, vmem, vmem, vmem, vmem, smem],
        out_specs=smem,
    )(source.astype(jnp.float32), target.astype(jnp.float32),
      w1, b1, w2_row, b2)
    return out[0, 0]


def _reference(source, target, w1, b1, w2_row, b2):
    # Pure-JAX mirror of the PyTorch forward (sigmoid -> log -> -100 clamp).
    x = jnp.concatenate([source, target], axis=0)
    h = jnp.maximum(x @ w1 + b1, 0.0)
    p = jax.nn.sigmoid(h @ w2_row.T + b2)
    b = source.shape[0]
    d_s, d_t = p[:b], p[b:]
    loss_s = jnp.mean(-jnp.maximum(jnp.log(d_s), -100.0))
    loss_t = jnp.mean(-jnp.maximum(jnp.log(1.0 - d_t), -100.0))
    return 0.5 * (loss_s + loss_t)


if __name__ == "__main__":
    hidden_1 = 64
    batch = 8

    key = jax.random.PRNGKey(0)
    k_src, k_tgt, k_w1, k_b1, k_w2, k_b2 = jax.random.split(key, 6)

    source = jax.random.normal(k_src, (batch, hidden_1), dtype=jnp.float32)
    target = jax.random.normal(k_tgt, (batch, hidden_1), dtype=jnp.float32)

    # Deterministic "Linear" params (fan-in uniform init like nn.Linear, fixed seed).
    bound1 = 1.0 / (hidden_1 ** 0.5)
    w1 = jax.random.uniform(k_w1, (hidden_1, hidden_1), jnp.float32, -bound1, bound1)
    b1 = jax.random.uniform(k_b1, (1, hidden_1), jnp.float32, -bound1, bound1)
    w2_row = jax.random.uniform(k_w2, (1, hidden_1), jnp.float32, -bound1, bound1)
    b2 = jax.random.uniform(k_b2, (1, 1), jnp.float32, -bound1, bound1)

    loss = adversarial_loss(source, target, w1, b1, w2_row, b2)
    loss = jax.block_until_ready(loss)

    ref = _reference(source, target, w1, b1, w2_row, b2)
    assert jnp.allclose(loss, ref, atol=1e-5, rtol=1e-5), (loss, ref)

    print("KERNEL_OK")
</pallas_src>

<mosaic_0001>
module attributes {stable_mosaic.version = 11 : i64} {
  func.func @_adv_loss_kernel(%arg0: memref<8x64xf32, #tpu.memory_space<vmem>>, %arg1: memref<8x64xf32, #tpu.memory_space<vmem>>, %arg2: memref<64x64xf32, #tpu.memory_space<vmem>>, %arg3: memref<1x64xf32, #tpu.memory_space<vmem>>, %arg4: memref<1x64xf32, #tpu.memory_space<vmem>>, %arg5: memref<1x1xf32, #tpu.memory_space<smem>>, %arg6: memref<1x1xf32, #tpu.memory_space<smem>>) attributes {dimension_semantics = [], scalar_prefetch = 0 : i64, scratch_operands = 0 : i64, tpu.core_type = #tpu.core_type<tc>} {
    %c0 = arith.constant 0 : index
    %c0_0 = arith.constant 0 : index
    %0 = vector.load %arg2[%c0, %c0_0] : memref<64x64xf32, #tpu.memory_space<vmem>>, vector<64x64xf32>
    %c0_1 = arith.constant 0 : index
    %c0_2 = arith.constant 0 : index
    %1 = vector.load %arg3[%c0_1, %c0_2] : memref<1x64xf32, #tpu.memory_space<vmem>>, vector<1x64xf32>
    %c0_3 = arith.constant 0 : index
    %c0_4 = arith.constant 0 : index
    %2 = vector.load %arg4[%c0_3, %c0_4] : memref<1x64xf32, #tpu.memory_space<vmem>>, vector<1x64xf32>
    %c0_5 = arith.constant 0 : index
    %c0_6 = arith.constant 0 : index
    %3 = memref.load %arg5[%c0_5, %c0_6] : memref<1x1xf32, #tpu.memory_space<smem>>
    %c0_7 = arith.constant 0 : index
    %c0_8 = arith.constant 0 : index
    %4 = vector.load %arg0[%c0_7, %c0_8] : memref<8x64xf32, #tpu.memory_space<vmem>>, vector<8x64xf32>
    %cst = arith.constant dense<0.000000e+00> : vector<8x64xf32>
    %5 = tpu.matmul %4, %0, %cst {dimension_numbers = #tpu.dot_dimension_numbers<[1], [0], [0], [1], [0, 0, 1, 1], [], []>} : vector<8x64xf32>, vector<64x64xf32>, vector<8x64xf32> -> vector<8x64xf32>
    %6 = vector.broadcast %1 : vector<1x64xf32> to vector<8x64xf32>
    %7 = arith.addf %5, %6 : vector<8x64xf32>
    %cst_9 = arith.constant 0.000000e+00 : f32
    %8 = vector.broadcast %cst_9 : f32 to vector<8x64xf32>
    %9 = arith.maximumf %7, %8 : vector<8x64xf32>
    %10 = vector.broadcast %2 : vector<1x64xf32> to vector<8x64xf32>
    %11 = arith.mulf %9, %10 : vector<8x64xf32>
    %cst_10 = arith.constant dense<0.000000e+00> : vector<8xf32>
    %12 = vector.multi_reduction <add>, %11, %cst_10 [1] : vector<8x64xf32> to vector<8xf32>
    %13 = vector.shape_cast %12 : vector<8xf32> to vector<8x1xf32>
    %14 = vector.broadcast %3 : f32 to vector<8x1xf32>
    %15 = arith.addf %13, %14 : vector<8x1xf32>
    %c0_11 = arith.constant 0 : index
    %c0_12 = arith.constant 0 : index
    %16 = vector.load %arg1[%c0_11, %c0_12] : memref<8x64xf32, #tpu.memory_space<vmem>>, vector<8x64xf32>
    %cst_13 = arith.constant dense<0.000000e+00> : vector<8x64xf32>
    %17 = tpu.matmul %16, %0, %cst_13 {dimension_numbers = #tpu.dot_dimension_numbers<[1], [0], [0], [1], [0, 0, 1, 1], [], []>} : vector<8x64xf32>, vector<64x64xf32>, vector<8x64xf32> -> vector<8x64xf32>
    %18 = vector.broadcast %1 : vector<1x64xf32> to vector<8x64xf32>
    %19 = arith.addf %17, %18 : vector<8x64xf32>
    %cst_14 = arith.constant 0.000000e+00 : f32
    %20 = vector.broadcast %cst_14 : f32 to vector<8x64xf32>
    %21 = arith.maximumf %19, %20 : vector<8x64xf32>
    %22 = vector.broadcast %2 : vector<1x64xf32> to vector<8x64xf32>
    %23 = arith.mulf %21, %22 : vector<8x64xf32>
    %cst_15 = arith.constant dense<0.000000e+00> : vector<8xf32>
    %24 = vector.multi_reduction <add>, %23, %cst_15 [1] : vector<8x64xf32> to vector<8xf32>
    %25 = vector.shape_cast %24 : vector<8xf32> to vector<8x1xf32>
    %26 = vector.broadcast %3 : f32 to vector<8x1xf32>
    %27 = arith.addf %25, %26 : vector<8x1xf32>
    %28 = arith.negf %15 : vector<8x1xf32>
    %29 = math.exp %28 : vector<8x1xf32>
    %cst_16 = arith.constant 1.000000e+00 : f32
    %30 = vector.broadcast %cst_16 : f32 to vector<8x1xf32>
    %31 = arith.addf %30, %29 : vector<8x1xf32>
    %32 = arith.divf %30, %31 : vector<8x1xf32>
    %33 = math.log %32 : vector<8x1xf32>
    %34 = arith.negf %27 : vector<8x1xf32>
    %35 = math.exp %34 : vector<8x1xf32>
    %cst_17 = arith.constant 1.000000e+00 : f32
    %36 = vector.broadcast %cst_17 : f32 to vector<8x1xf32>
    %37 = arith.addf %36, %35 : vector<8x1xf32>
    %38 = arith.divf %36, %37 : vector<8x1xf32>
    %39 = math.log %38 : vector<8x1xf32>
    %cst_18 = arith.constant -1.000000e+02 : f32
    %40 = vector.broadcast %cst_18 : f32 to vector<8x1xf32>
    %41 = arith.maximumf %33, %40 : vector<8x1xf32>
    %cst_19 = arith.constant 0.000000e+00 : f32
    %42 = vector.broadcast %cst_19 : f32 to vector<8x1xf32>
    %43 = arith.subf %42, %41 : vector<8x1xf32>
    %cst_20 = arith.constant 6.250000e-02 : f32
    %44 = vector.broadcast %cst_20 : f32 to vector<8x1xf32>
    %45 = arith.mulf %43, %44 : vector<8x1xf32>
    %46 = arith.subf %39, %27 : vector<8x1xf32>
    %cst_21 = arith.constant -1.000000e+02 : f32
    %47 = vector.broadcast %cst_21 : f32 to vector<8x1xf32>
    %48 = arith.maximumf %46, %47 : vector<8x1xf32>
    %cst_22 = arith.constant 0.000000e+00 : f32
    %49 = vector.broadcast %cst_22 : f32 to vector<8x1xf32>
    %50 = arith.subf %49, %48 : vector<8x1xf32>
    %cst_23 = arith.constant 6.250000e-02 : f32
    %51 = vector.broadcast %cst_23 : f32 to vector<8x1xf32>
    %52 = arith.mulf %50, %51 : vector<8x1xf32>
    %53 = arith.addf %45, %52 : vector<8x1xf32>
    %54 = vector.shape_cast %53 : vector<8x1xf32> to vector<1x8x1xf32>
    %cst_24 = arith.constant dense<0.000000e+00> : vector<1xf32>
    %55 = vector.multi_reduction <add>, %54, %cst_24 [1, 2] : vector<1x8x1xf32> to vector<1xf32>
    %56 = vector.shape_cast %55 : vector<1xf32> to vector<1x1x1xf32>
    %57 = vector.extract %56[0, 0, 0] : f32 from vector<1x1x1xf32>
    %c0_25 = arith.constant 0 : index
    %c0_26 = arith.constant 0 : index
    %58 = memref.load %arg6[%c0_25, %c0_26] : memref<1x1xf32, #tpu.memory_space<smem>>
    memref.store %57, %arg6[%c0_25, %c0_26] : memref<1x1xf32, #tpu.memory_space<smem>>
    return
  }
}

</mosaic_0001>

<llo_original>
// kernel: tpu_custom_call.1
$region0: #{tpu_custom_call.1}
  #allocation0 [shape = 'u32[]', space=smem, size = 0x4, offset = 0x4, fixed_abs, tag = 'smem constant byte address 0x4 - core index']
  #allocation1 [shape = 'u32[144,128]{1,0:T(1,128)}', space=vmem, size = 0x12000, scoped, tag = 'internal scratch']
  #allocation2 [shape = 'f32[1,1]{1,0:T(1,128)S(6)}', space=smem, size = 0x200, scoped, tag = 'scoped memory for tpu_custom_call.1']
  %s0 = inlined_call_operand.hbm [shape: f32[8,64], index: 0, kind: input, shape index: {}]
  %s1 = inlined_call_operand.hbm [shape: f32[8,64], index: 1, kind: input, shape index: {}]
  %s2 = inlined_call_operand.hbm [shape: f32[64,64], index: 2, kind: input, shape index: {}]
  %s3 = inlined_call_operand.vmem [shape: f32[1,64], index: 3, kind: input, shape index: {}]
  %s4 = inlined_call_operand.vmem [shape: f32[1,64], index: 4, kind: input, shape index: {}]
  %s5 = inlined_call_operand.<no memory space> [shape: f32[1,1], index: 5, kind: input, shape index: {}]
  %s6 = inlined_call_operand.hbm [shape: f32[1,1], index: 6, kind: output, shape index: {}]
  %s7 = sld [smem:[#allocation0]]
  $region46: #{tpu_custom_call.1} parent=0
    _
  %s9 = ssub.s32 1, %s7
  %s10 = scalar_select 0, %s9, %s7
  %11 = sst [smem:[#allocation2]] %s5
  $region1: #{tpu_custom_call.1} parent=0
    #allocation3 [shape = 'u8[4096]{0}', space=vmem, size = 0x1000, scoped, tag = 'input window, operand 0, single buffered']
    #allocation4 [shape = 's32[1]{0}', space=sflag, size = 0x4, scoped, tag = 'scoped memory for tpu_custom_call.1']
    #allocation5 [shape = 's32[1]{0}', space=sflag, size = 0x4, scoped, tag = 'scoped memory for tpu_custom_call.1']
    #allocation6 [shape = 'u8[4096]{0}', space=vmem, size = 0x1000, scoped, tag = 'input window, operand 1, single buffered']
    #allocation7 [shape = 's32[1]{0}', space=sflag, size = 0x4, scoped, tag = 'scoped memory for tpu_custom_call.1']
    #allocation8 [shape = 'u8[32768]{0}', space=vmem, size = 0x8000, scoped, tag = 'input window, operand 2, single buffered']
    #allocation9 [shape = 'u8[512]{0}', space=smem, size = 0x200, scoped, tag = 'output window, operand 0, single buffered']
    %12 = vsyncpa [#allocation4], 0
    %13 = vsyncpa [#allocation7], 0
    %14 = vsyncpa [#allocation5], 0
    // Predicated region
    $region2: #{tpu_custom_call.1} parent=1 // pred_check
      _
    $region3: #{tpu_custom_call.1} parent=1 // pred_check_branch
      %16 = sbr.rel (0) target = $region5
    $region4: #{tpu_custom_call.1} parent=1 // pred_region
      %s18 = ssub.s32 128, 128
      %19 = vsyncadd [#allocation4], %s18
      %s21 = sshll.u32 [#allocation3], 4
      %s22 = int_to_ptr.vmem [resolvable:$true] %s21
      %24 = dma.hbm_to_vmem [thread:$0]  %s0, 128, %s22, [#allocation4]
    $region5: #{tpu_custom_call.1} parent=1 // pred_fallthru
      _
    // Predicated region
    $region6: #{tpu_custom_call.1} parent=1 // pred_check
      _
    $region7: #{tpu_custom_call.1} parent=1 // pred_check_branch
      %26 = sbr.rel (0) target = $region9
    $region8: #{tpu_custom_call.1} parent=1 // pred_region
      %s28 = ssub.s32 128, 128
      %29 = vsyncadd [#allocation7], %s28
      %s31 = sshll.u32 [#allocation6], 4
      %s32 = int_to_ptr.vmem [resolvable:$true] %s31
      %34 = dma.hbm_to_vmem [thread:$0]  %s1, 128, %s32, [#allocation7]
    $region9: #{tpu_custom_call.1} parent=1 // pred_fallthru
      _
    // Predicated region
    $region10: #{tpu_custom_call.1} parent=1 // pred_check
      _
    $region11: #{tpu_custom_call.1} parent=1 // pred_check_branch
      %36 = sbr.rel (0) target = $region13
    $region12: #{tpu_custom_call.1} parent=1 // pred_region
      %s38 = ssub.s32 1024, 1024
      %39 = vsyncadd [#allocation7], %s38
      %s40 = sshll.u32 [#allocation8], 4
      %s41 = int_to_ptr.vmem [resolvable:$true] %s40
      %46 = dma.hbm_to_vmem [thread:$0]  %s2, 1024, %s41, [#allocation7], 128, 128, 8
    $region13: #{tpu_custom_call.1} parent=1 // pred_fallthru
      _
    // Predicated region
    $region14: #{tpu_custom_call.1} parent=1 // pred_check
      _
    $region15: #{tpu_custom_call.1} parent=1 // pred_check_branch
      %48 = sbr.rel (0) target = $region17
    $region16: #{tpu_custom_call.1} parent=1 // pred_region
      _
    $region17: #{tpu_custom_call.1} parent=1 // pred_fallthru
      _
    // Predicated region
    $region18: #{tpu_custom_call.1} parent=1 // pred_check
      _
    $region19: #{tpu_custom_call.1} parent=1 // pred_check_branch
      %50 = sbr.rel (0) target = $region21
    $region20: #{tpu_custom_call.1} parent=1 // pred_region
      _
    $region21: #{tpu_custom_call.1} parent=1 // pred_fallthru
      _
    // Predicated region
    $region22: #{tpu_custom_call.1} parent=1 // pred_check
      _
    $region23: #{tpu_custom_call.1} parent=1 // pred_check_branch
      %52 = sbr.rel (0) target = $region25
    $region24: #{tpu_custom_call.1} parent=1 // pred_region
      _
    $region25: #{tpu_custom_call.1} parent=1 // pred_fallthru
      _
    // Predicated region
    $region26: #{tpu_custom_call.1} parent=1 // pred_check
      _
    $region27: #{tpu_custom_call.1} parent=1 // pred_check_branch
      %54 = sbr.rel (0) target = $region29
    $region28: #{tpu_custom_call.1} parent=1 // pred_region
      %55 = dma.done [#allocation4], 128
    $region29: #{tpu_custom_call.1} parent=1 // pred_fallthru
      _
    // Predicated region
    $region30: #{tpu_custom_call.1} parent=1 // pred_check
      _
    $region31: #{tpu_custom_call.1} parent=1 // pred_check_branch
      %57 = sbr.rel (0) target = $region33
    $region32: #{tpu_custom_call.1} parent=1 // pred_region
      %58 = dma.done [#allocation7], 128
    $region33: #{tpu_custom_call.1} parent=1 // pred_fallthru
      _
    // Predicated region
    $region34: #{tpu_custom_call.1} parent=1 // pred_check
      _
    $region35: #{tpu_custom_call.1} parent=1 // pred_check_branch
      %60 = sbr.rel (0) target = $region37
    $region36: #{tpu_custom_call.1} parent=1 // pred_region
      %61 = dma.done [#allocation7], 1024
    $region37: #{tpu_custom_call.1} parent=1 // pred_fallthru
      _
    %v62 = vld [vmem:[#allocation8] sm:$0xff]
    %v63 = vld [vmem:[#allocation8 + $0x8] sm:$0xff]
    %v64 = vld [vmem:[#allocation8 + $0x10] sm:$0xff]
    %v65 = vld [vmem:[#allocation8 + $0x18] sm:$0xff]
    %v66 = vld [vmem:[#allocation8 + $0x20] sm:$0xff]
    %v67 = vld [vmem:[#allocation8 + $0x28] sm:$0xff]
    %v68 = vld [vmem:[#allocation8 + $0x30] sm:$0xff]
    %v69 = vld [vmem:[#allocation8 + $0x38] sm:$0xff]
    %v70 = vld [vmem:[%s3] sm:$0x1]
    %v71 = vld [vmem:[%s4] sm:$0x1]
    %s72 = sld [smem:[#allocation2]]
    %v73 = vld [vmem:[#allocation3] sm:$0xff]
    %v75 = vlaneseq
    %v76 = vshrl.u32 %v75, 7
    %v77 = vsub.s32 0, %v76
    %v78 = vrot.slane %v70, %v77
    %vm80 = vcmask 523264
    %v82 = vsel %vm80, %v73, 0
    %84 = vmatprep.subr.mxu0 0.0
    %85 = vmatpush1.msra.mxu0 %v62
    %86 = vmatprep.subr.mxu0 0.0
    %87 = vmatpush1.msra.mxu0 %v63
    %88 = vmatprep.subr.mxu0 0.0
    %89 = vmatpush1.msra.mxu0 %v64
    %90 = vmatprep.subr.mxu0 0.0
    %91 = vmatpush1.msra.mxu0 %v65
    %92 = vmatprep.subr.mxu0 0.0
    %93 = vmatpush1.msra.mxu0 %v66
    %94 = vmatprep.subr.mxu0 0.0
    %95 = vmatpush1.msra.mxu0 %v67
    %96 = vmatprep.subr.mxu0 0.0
    %97 = vmatpush1.msra.mxu0 %v68
    %98 = vmatprep.subr.mxu0 0.0
    %99 = vmatpush1.msra.mxu0 %v69
    %100 = vmatprep.subr.mxu0 0.0
    %101 = vmatpush1.msra.mxu0 0.0
    %102 = vmatprep.subr.mxu0 0.0
    %103 = vmatpush1.msra.mxu0 0.0
    %104 = vmatprep.subr.mxu0 0.0
    %105 = vmatpush1.msra.mxu0 0.0
    %106 = vmatprep.subr.mxu0 0.0
    %107 = vmatpush1.msra.mxu0 0.0
    %108 = vmatprep.subr.mxu0 0.0
    %109 = vmatpush1.msra.mxu0 0.0
    %110 = vmatprep.subr.mxu0 0.0
    %111 = vmatpush1.msra.mxu0 0.0
    %112 = vmatprep.subr.mxu0 0.0
    %113 = vmatpush1.msra.mxu0 0.0
    %114 = vmatprep.subr.mxu0 0.0
    %115 = vmatpush1.msra.mxu0 0.0
    %116 = vmatprep.subr.mxu0 0.0
    %117 = vmatpush1.msra.mxu0 0.0
    %118 = vmatprep.subr.mxu0 0.0
    %119 = vmatpush1.msra.mxu0 0.0
    %120 = vmatprep.subr.mxu0 0.0
    %121 = vmatpush1.msra.mxu0 0.0
    %122 = vmatprep.subr.mxu0 0.0
    %123 = vmatpush1.msra.mxu0 0.0
    %124 = vmatprep.subr.mxu0 0.0
    %125 = vmatpush1.msra.mxu0 0.0
    %126 = vmatprep.subr.mxu0 0.0
    %127 = vmatpush1.msra.mxu0 0.0
    %128 = vmatprep.subr.mxu0 0.0
    %129 = vmatpush1.msra.mxu0 0.0
    %130 = vmatprep.subr.mxu0 0.0
    %131 = vmatpush1.msra.mxu0 0.0
    %132 = vmatprep.subr.mxu0 0.0
    %133 = vmatpush1.msra.mxu0 0.0
    %134 = vmatprep.subr.mxu0 0.0
    %135 = vmatpush1.msra.mxu0 0.0
    %136 = vmatprep.subr.mxu0 0.0
    %137 = vmatpush1.msra.mxu0 0.0
    %138 = vmatprep.subr.mxu0 0.0
    %139 = vmatpush1.msra.mxu0 0.0
    %140 = vmatprep.subr.mxu0 0.0
    %141 = vmatpush1.msra.mxu0 0.0
    %142 = vmatprep.subr.mxu0 0.0
    %143 = vmatpush1.msra.mxu0 0.0
    %144 = vmatprep.subr.mxu0 0.0
    %145 = vmatpush1.msra.mxu0 0.0
    %146 = vmatprep.subr.mxu0 0.0
    %147 = vmatpush1.msra.mxu0 0.0
    %148 = vmatprep.mubr.f32.mxu0 0.0
    %149 = vmatmul.mubr.f32.gmra.mrb[0].mxu0 %v82
    %v150 = vpop.f32.mrb[0].mxu0
    %v151 = vadd.f32 %v78, %v150
    %v152 = vpop.f32.mrb[0].mxu0
    %153 = vdwg.mxu0
    %v154 = vmax.f32 %v151, 0.0
    %v156 = vlaneseq
    %v157 = vshrl.u32 %v156, 7
    %v158 = vsub.s32 0, %v157
    %v159 = vrot.slane %v71, %v158
    %v161 = vmul.f32 %v154, %v159
    %v162 = vsel %vm80, %v161, 0.0
    %163 = vadd.xlane.f32.xlu0 %v162
    %v164 = vpop.xlane.xlu0 %163
    %v165 = vstv %s72
    %v166 = vadd.f32 %v164, %v165
    %v167 = vld [vmem:[#allocation6] sm:$0xff]
    %v169 = vsel %vm80, %v167, 0
    %171 = vmatprep.subr.mxu0 0.0
    %172 = vmatpush1.msra.mxu0 %v62
    %173 = vmatprep.subr.mxu0 0.0
    %174 = vmatpush1.msra.mxu0 %v63
    %175 = vmatprep.subr.mxu0 0.0
    %176 = vmatpush1.msra.mxu0 %v64
    %177 = vmatprep.subr.mxu0 0.0
    %178 = vmatpush1.msra.mxu0 %v65
    %179 = vmatprep.subr.mxu0 0.0
    %180 = vmatpush1.msra.mxu0 %v66
    %181 = vmatprep.subr.mxu0 0.0
    %182 = vmatpush1.msra.mxu0 %v67
    %183 = vmatprep.subr.mxu0 0.0
    %184 = vmatpush1.msra.mxu0 %v68
    %185 = vmatprep.subr.mxu0 0.0
    %186 = vmatpush1.msra.mxu0 %v69
    %187 = vmatprep.subr.mxu0 0.0
    %188 = vmatpush1.msra.mxu0 0.0
    %189 = vmatprep.subr.mxu0 0.0
    %190 = vmatpush1.msra.mxu0 0.0
    %191 = vmatprep.subr.mxu0 0.0
    %192 = vmatpush1.msra.mxu0 0.0
    %193 = vmatprep.subr.mxu0 0.0
    %194 = vmatpush1.msra.mxu0 0.0
    %195 = vmatprep.subr.mxu0 0.0
    %196 = vmatpush1.msra.mxu0 0.0
    %197 = vmatprep.subr.mxu0 0.0
    %198 = vmatpush1.msra.mxu0 0.0
    %199 = vmatprep.subr.mxu0 0.0
    %200 = vmatpush1.msra.mxu0 0.0
    %201 = vmatprep.subr.mxu0 0.0
    %202 = vmatpush1.msra.mxu0 0.0
    %203 = vmatprep.subr.mxu0 0.0
    %204 = vmatpush1.msra.mxu0 0.0
    %205 = vmatprep.subr.mxu0 0.0
    %206 = vmatpush1.msra.mxu0 0.0
    %207 = vmatprep.subr.mxu0 0.0
    %208 = vmatpush1.msra.mxu0 0.0
    %209 = vmatprep.subr.mxu0 0.0
    %210 = vmatpush1.msra.mxu0 0.0
    %211 = vmatprep.subr.mxu0 0.0
    %212 = vmatpush1.msra.mxu0 0.0
    %213 = vmatprep.subr.mxu0 0.0
    %214 = vmatpush1.msra.mxu0 0.0
    %215 = vmatprep.subr.mxu0 0.0
    %216 = vmatpush1.msra.mxu0 0.0
    %217 = vmatprep.subr.mxu0 0.0
    %218 = vmatpush1.msra.mxu0 0.0
    %219 = vmatprep.subr.mxu0 0.0
    %220 = vmatpush1.msra.mxu0 0.0
    %221 = vmatprep.subr.mxu0 0.0
    %222 = vmatpush1.msra.mxu0 0.0
    %223 = vmatprep.subr.mxu0 0.0
    %224 = vmatpush1.msra.mxu0 0.0
    %225 = vmatprep.subr.mxu0 0.0
    %226 = vmatpush1.msra.mxu0 0.0
    %227 = vmatprep.subr.mxu0 0.0
    %228 = vmatpush1.msra.mxu0 0.0
    %229 = vmatprep.subr.mxu0 0.0
    %230 = vmatpush1.msra.mxu0 0.0
    %231 = vmatprep.subr.mxu0 0.0
    %232 = vmatpush1.msra.mxu0 0.0
    %233 = vmatprep.subr.mxu0 0.0
    %234 = vmatpush1.msra.mxu0 0.0
    %235 = vmatprep.mubr.f32.mxu0 0.0
    %236 = vmatmul.mubr.f32.gmra.mrb[0].mxu0 %v169
    %v237 = vpop.f32.mrb[0].mxu0
    %v238 = vadd.f32 %v78, %v237
    %v239 = vpop.f32.mrb[0].mxu0
    %240 = vdwg.mxu0
    %v241 = vmax.f32 %v238, 0.0
    %v242 = vmul.f32 %v241, %v159
    %v243 = vsel %vm80, %v242, 0.0
    %244 = vadd.xlane.f32.xlu0 %v243
    %v245 = vpop.xlane.xlu0 %244
    %v246 = vadd.f32 %v245, %v165
    %v247 = vxor.u32 %v166, 2147483648
    %v248 = vmul.f32 %v247, 1.442695
    %v249 = vpow.pop %v248
    %v250 = vadd.f32 %v249, 1.0
    %v251 = vrcp.pop %v250
    %v252 = vmul.f32 1.0, %v251
    %v253 = vlog2.pop %v252
    %v254 = vmul.f32 %v253, 0.6931472
    %v255 = vxor.u32 %v246, 2147483648
    %v256 = vmul.f32 %v255, 1.442695
    %v257 = vpow.pop %v256
    %v258 = vadd.f32 %v257, 1.0
    %v259 = vrcp.pop %v258
    %v260 = vmul.f32 1.0, %v259
    %v261 = vlog2.pop %v260
    %v262 = vmul.f32 %v261, 0.6931472
    %v263 = vmax.f32 %v254, -100.0
    %v264 = vsub.f32 0.0, %v263
    %v265 = vmul.f32 %v264, 0.0625
    %v266 = vsub.f32 %v262, %v246
    %v267 = vmax.f32 %v266, -100.0
    %v268 = vsub.f32 0.0, %v267
    %v269 = vmul.f32 %v268, 0.0625
    %v270 = vadd.f32 %v265, %v269
    %vm271 = vcmask 7168
    %v272 = vsel %vm271, %v270, 0.0
    %273 = vadd.xlane.f32.xlu0 %v272
    %v274 = vpop.xlane.xlu0 %273
    %v275 = vrot.slane %v274, 4
    %v276 = vadd.f32 %v274, %v275
    %v277 = vrot.slane %v276, 2
    %v278 = vadd.f32 %v276, %v277
    %v279 = vrot.slane %v278, 1
    %v280 = vadd.f32 %v278, %v279
    %s281 = vtos %v280
    %s282 = scalar_lea.smem [#allocation9], 0
    %283 = sst [smem:[%s282]] %s281
    // Predicated region
    $region38: #{tpu_custom_call.1} parent=1 // pred_check
      _
    $region39: #{tpu_custom_call.1} parent=1 // pred_check_branch
      %285 = sbr.rel (0) target = $region41
    $region40: #{tpu_custom_call.1} parent=1 // pred_region
      %s287 = ssub.s32 16, 16
      %288 = vsyncadd [#allocation5], %s287
      %291 = dma.smem_to_hbm [#allocation9], 16, %s6, [#allocation5]
    $region41: #{tpu_custom_call.1} parent=1 // pred_fallthru
      _
    // Predicated region
    $region42: #{tpu_custom_call.1} parent=1 // pred_check
      _
    $region43: #{tpu_custom_call.1} parent=1 // pred_check_branch
      %293 = sbr.rel (0) target = $region45
    $region44: #{tpu_custom_call.1} parent=1 // pred_region
      %294 = dma.done [#allocation5], 16
    $region45: #{tpu_custom_call.1} parent=1 // pred_fallthru
      _
    %295 = sfence
    %296 = vsyncpa [#allocation4], 1
    %297 = vsyncpa [#allocation7], 1
    %298 = vsyncpa [#allocation5], 1

</llo_original>
